<compile_context>
chip_gen: v7x
topology: tpu7x:2x2x1
jax: 0.10.0
libtpu: 0.0.40
codegen_flags: <defaults>
</compile_context>

<pallas_src>
import functools
import math

import jax
import jax.numpy as jnp
from jax import lax
from jax.experimental import pallas as pl
from jax.experimental.pallas import tpu as pltpu


def _round_up(x, m):
    return (x + m - 1) // m * m


# ---------------------------------------------------------------------------
# Pallas kernel: one M-tile of  out = [relu]( patches @ W_scaled + bias )
# ---------------------------------------------------------------------------
def _conv_bn_act_kernel(p_ref, w_ref, b_ref, o_ref, *, apply_relu):
    # p_ref: [TILE_M, Kp] bf16      w_ref: [Kp, Cout] bf16 (BN scale folded in)
    # b_ref: [1, Cout]    f32       o_ref: [TILE_M, Cout] f32
    acc = jnp.dot(p_ref[...], w_ref[...], preferred_element_type=jnp.float32)
    y = acc + b_ref[...]
    if apply_relu:
        y = jnp.maximum(y, 0.0)
    o_ref[...] = y.astype(o_ref.dtype)


# ---------------------------------------------------------------------------
# Glue: im2col for a 3x3, pad=1 convolution (pure data movement, no FLOPs)
# ---------------------------------------------------------------------------
def _im2col_3x3_p1(x_nhwc, stride):
    N, H, W, C = x_nhwc.shape
    Ho = (H + 2 - 3) // stride + 1
    Wo = (W + 2 - 3) // stride + 1
    xp = jnp.pad(x_nhwc, ((0, 0), (1, 1), (1, 1), (0, 0)))
    cols = []
    for ky in range(3):
        for kx in range(3):
            sl = xp[:, ky:ky + stride * (Ho - 1) + 1:stride,
                       kx:kx + stride * (Wo - 1) + 1:stride, :]
            cols.append(sl)
    patches = jnp.stack(cols, axis=3)          # [N, Ho, Wo, 9, C], tap order (ky, kx)
    patches = patches.reshape(N * Ho * Wo, 9 * C)
    return patches, (N, Ho, Wo)


def _pick_tile_m(M):
    """Rows of output per grid step.  Capped so the double-buffered bf16 patch
    tile + f32 output tile stay well inside v7x's 32 MiB scoped / 64 MiB
    physical VMEM (and trivially inside v5e/v6e's 128 MiB)."""
    cap = 1024
    if M >= cap:
        return cap
    return _round_up(M, 8)


def conv3x3_bn_act(x_nhwc, w_hwio, conv_b, gamma, beta, mean, var,
                   stride, apply_relu, eps=1e-5):
    Cin, Cout = w_hwio.shape[2], w_hwio.shape[3]

    patches, (N, Ho, Wo) = _im2col_3x3_p1(x_nhwc, stride)
    M, K = patches.shape

    # Fold Conv bias + eval-mode BatchNorm: scale goes into the weight columns,
    # the remaining per-channel bias is added in the kernel epilogue.
    scale = gamma / jnp.sqrt(var + eps)
    bias = (beta + scale * (conv_b - mean)).astype(jnp.float32).reshape(1, Cout)
    w2d = w_hwio.reshape(K, Cout) * scale[None, :]      # (ky, kx, cin) order

    # Alignment padding: K (contraction dim) to a multiple of 8, M (row dim)
    # to a multiple of the tile.  Zero rows/cols are inert.
    tile_m = _pick_tile_m(M)
    Kp = _round_up(K, 8)
    Mp = _round_up(M, tile_m)

    patches = jnp.pad(patches, ((0, Mp - M), (0, Kp - K))).astype(jnp.bfloat16)
    w2d = jnp.pad(w2d, ((0, Kp - K), (0, 0))).astype(jnp.bfloat16)

    grid = (Mp // tile_m,)
    flops = 2 * Mp * Kp * Cout
    bytes_accessed = (Mp * Kp + Kp * Cout) * 2 + (Mp * Cout + Cout) * 4

    out = pl.pallas_call(
        functools.partial(_conv_bn_act_kernel, apply_relu=apply_relu),
        out_shape=jax.ShapeDtypeStruct((Mp, Cout), jnp.float32),
        grid_spec=pltpu.PrefetchScalarGridSpec(
            num_scalar_prefetch=0,
            grid=grid,
            in_specs=[
                pl.BlockSpec((tile_m, Kp), lambda i: (i, 0)),   # patches: streamed
                pl.BlockSpec((Kp, Cout), lambda i: (0, 0)),     # weights: resident
                pl.BlockSpec((1, Cout), lambda i: (0, 0)),      # bias:    resident
            ],
            out_specs=pl.BlockSpec((tile_m, Cout), lambda i: (i, 0)),
        ),
        compiler_params=pltpu.CompilerParams(
            dimension_semantics=("parallel",),
            vmem_limit_bytes=32 * 1024 * 1024,
        ),
        cost_estimate=pl.CostEstimate(
            flops=flops, transcendentals=0, bytes_accessed=bytes_accessed),
    )(patches, w2d, bias)

    return out[:M].reshape(N, Ho, Wo, Cout)


# ---------------------------------------------------------------------------
# Stem parameters (deterministic synthetic init; shapes match nn.Module __init__)
# ---------------------------------------------------------------------------
def init_stem_params(key, in_dim=3, out_dim=32):
    layer_cfg = [(in_dim, out_dim // 4, 2),
                 (out_dim // 4, out_dim // 2, 2),
                 (out_dim // 2, out_dim, 2),
                 (out_dim, out_dim, 1)]
    params = []
    for cin, cout, stride in layer_cfg:
        key, k1, k2, k3, k4, k5, k6 = jax.random.split(key, 7)
        fan_in = cin * 9
        params.append(dict(
            w=jax.random.normal(k1, (3, 3, cin, cout), jnp.float32) / math.sqrt(fan_in),
            b=0.1 * jax.random.normal(k2, (cout,), jnp.float32),
            gamma=1.0 + 0.1 * jax.random.normal(k3, (cout,), jnp.float32),
            beta=0.1 * jax.random.normal(k4, (cout,), jnp.float32),
            mean=0.1 * jax.random.normal(k5, (cout,), jnp.float32),
            var=jax.random.uniform(k6, (cout,), jnp.float32, minval=0.5, maxval=1.5),
            stride=stride,
        ))
    return params


def stem_forward(x_nchw, params):
    """Pallas implementation. Input/output NCHW to match the PyTorch module."""
    x = jnp.transpose(x_nchw, (0, 2, 3, 1))        # NCHW -> NHWC
    n = len(params)
    for i, p in enumerate(params):
        # Layers 0..2: Conv+BN+ReLU ; layer 3: Conv+BN (no trailing activation).
        x = conv3x3_bn_act(x, p['w'], p['b'], p['gamma'], p['beta'],
                           p['mean'], p['var'], p['stride'],
                           apply_relu=(i < n - 1))
    return jnp.transpose(x, (0, 3, 1, 2))          # NHWC -> NCHW


def stem_reference(x_nchw, params, eps=1e-5):
    """Pure-JAX f32 reference (lax.conv) replicating the PyTorch eval-mode forward."""
    x = jnp.transpose(x_nchw, (0, 2, 3, 1))
    n = len(params)
    for i, p in enumerate(params):
        y = lax.conv_general_dilated(
            x, p['w'], window_strides=(p['stride'],) * 2,
            padding=((1, 1), (1, 1)),
            dimension_numbers=('NHWC', 'HWIO', 'NHWC'))
        y = y + p['b']
        y = (y - p['mean']) / jnp.sqrt(p['var'] + eps) * p['gamma'] + p['beta']
        if i < n - 1:
            y = jnp.maximum(y, 0.0)
        x = y
    return jnp.transpose(x, (0, 3, 1, 2))


if __name__ == "__main__":
    # Small shapes consistent with the module: batch=2, in_dim=3, img=16, out_dim=32.
    key = jax.random.PRNGKey(0)
    kx, kp = jax.random.split(key)
    x = jax.random.normal(kx, (2, 3, 16, 16), jnp.float32)
    params = init_stem_params(kp, in_dim=3, out_dim=32)

    out = jax.block_until_ready(stem_forward(x, params))
    ref = jax.block_until_ready(stem_reference(x, params))

    assert out.shape == (2, 32, 2, 2), out.shape
    max_err = float(jnp.max(jnp.abs(out - ref)))
    # bf16 matmul inputs (f32 accumulate) vs. the f32 reference -> relaxed tolerance.
    assert jnp.allclose(out, ref, rtol=3e-2, atol=3e-2), max_err
    print("KERNEL_OK")
</pallas_src>

<mosaic_0001>
module attributes {stable_mosaic.version = 11 : i64} {
  func.func @_conv_bn_act_kernel(%arg0: i32, %arg1: memref<128x32xbf16, #tpu.memory_space<vmem>>, %arg2: memref<32x8xbf16, #tpu.memory_space<vmem>>, %arg3: memref<1x8xf32, #tpu.memory_space<vmem>>, %arg4: memref<128x8xf32, #tpu.memory_space<vmem>>) attributes {dimension_semantics = [#tpu.dimension_semantics<parallel>], iteration_bounds = array<i64: 1>, scalar_prefetch = 0 : i64, scratch_operands = 0 : i64, tpu.core_type = #tpu.core_type<tc>, window_params = [{transform_indices = @transform_0, window_bounds = array<i64: 128, 32>}, {pipeline_mode = #tpu.pipeline_mode<synchronous>, transform_indices = @transform_1, window_bounds = array<i64: 32, 8>}, {pipeline_mode = #tpu.pipeline_mode<synchronous>, transform_indices = @transform_2, window_bounds = array<i64: 1, 8>}, {transform_indices = @transform_3, window_bounds = array<i64: 128, 8>}]} {
    %c0 = arith.constant 0 : index
    %c0_0 = arith.constant 0 : index
    %0 = vector.load %arg1[%c0, %c0_0] : memref<128x32xbf16, #tpu.memory_space<vmem>>, vector<128x32xbf16>
    %c0_1 = arith.constant 0 : index
    %c0_2 = arith.constant 0 : index
    %1 = vector.load %arg2[%c0_1, %c0_2] : memref<32x8xbf16, #tpu.memory_space<vmem>>, vector<32x8xbf16>
    %cst = arith.constant dense<0.000000e+00> : vector<128x8xf32>
    %2 = tpu.matmul %0, %1, %cst {dimension_numbers = #tpu.dot_dimension_numbers<[1], [0], [0], [1], [0, 0, 1, 1], [], []>} : vector<128x32xbf16>, vector<32x8xbf16>, vector<128x8xf32> -> vector<128x8xf32>
    %c0_3 = arith.constant 0 : index
    %c0_4 = arith.constant 0 : index
    %3 = vector.load %arg3[%c0_3, %c0_4] : memref<1x8xf32, #tpu.memory_space<vmem>>, vector<1x8xf32>
    %4 = vector.broadcast %3 : vector<1x8xf32> to vector<128x8xf32>
    %5 = arith.addf %2, %4 : vector<128x8xf32>
    %cst_5 = arith.constant 0.000000e+00 : f32
    %6 = vector.broadcast %cst_5 : f32 to vector<128x8xf32>
    %7 = arith.maximumf %5, %6 : vector<128x8xf32>
    %c0_6 = arith.constant 0 : index
    %c0_7 = arith.constant 0 : index
    %8 = vector.load %arg4[%c0_6, %c0_7] : memref<128x8xf32, #tpu.memory_space<vmem>>, vector<128x8xf32>
    tpu.vector_store %arg4[%c0_6, %c0_7], %7 {strides = array<i32>} : memref<128x8xf32, #tpu.memory_space<vmem>>, vector<128x8xf32>,
    return
  }
  func.func @transform_0(%arg0: i32) -> (i32, i32) {
    %c0_i32 = arith.constant 0 : i32
    %c0_i32_0 = arith.constant 0 : i32
    return %arg0, %c0_i32 : i32, i32
  }
  func.func @transform_1(%arg0: i32) -> (i32, i32) {
    %c0_i32 = arith.constant 0 : i32
    %c0_i32_0 = arith.constant 0 : i32
    %c0_i32_1 = arith.constant 0 : i32
    return %c0_i32, %c0_i32_0 : i32, i32
  }
  func.func @transform_2(%arg0: i32) -> (i32, i32) {
    %c0_i32 = arith.constant 0 : i32
    %c0_i32_0 = arith.constant 0 : i32
    %c0_i32_1 = arith.constant 0 : i32
    return %c0_i32, %c0_i32_0 : i32, i32
  }
  func.func @transform_3(%arg0: i32) -> (i32, i32) {
    %c0_i32 = arith.constant 0 : i32
    %c0_i32_0 = arith.constant 0 : i32
    return %arg0, %c0_i32 : i32, i32
  }
}

</mosaic_0001>

<llo_original>
// kernel: tpu_custom_call.1
$region0: #{tpu_custom_call.1}
  #allocation0 [shape = 'u32[]', space=smem, size = 0x4, offset = 0x4, fixed_abs, tag = 'smem constant byte address 0x4 - core index']
  #allocation1 [shape = 'u32[144,128]{1,0:T(1,128)}', space=vmem, size = 0x12000, scoped, tag = 'internal scratch']
  %s0 = inlined_call_operand.vmem [shape: bf16[128,32], index: 0, kind: input, shape index: {}]
  %s1 = inlined_call_operand.vmem [shape: bf16[32,8], index: 1, kind: input, shape index: {}]
  %s2 = inlined_call_operand.vmem [shape: f32[1,8], index: 2, kind: input, shape index: {}]
  %s3 = inlined_call_operand.vmem [shape: f32[128,8], index: 3, kind: output, shape index: {}]
  %s4 = sld [smem:[#allocation0]]
  $region22: #{tpu_custom_call.1} parent=0
    _
  %s6 = ssub.s32 1, %s4
  %s7 = scalar_select 0, %s6, %s4
  // Predicated region
  $region2: #{tpu_custom_call.1} parent=0 // pred_check
    _
  $region3: #{tpu_custom_call.1} parent=0 // pred_check_branch
    %9 = sbr.rel (0) target = $region5
  $region4: #{tpu_custom_call.1} parent=0 // pred_region
    _
  $region5: #{tpu_custom_call.1} parent=0 // pred_fallthru
    _
  // Predicated region
  $region6: #{tpu_custom_call.1} parent=0 // pred_check
    _
  $region7: #{tpu_custom_call.1} parent=0 // pred_check_branch
    %11 = sbr.rel (0) target = $region9
  $region8: #{tpu_custom_call.1} parent=0 // pred_region
    _
  $region9: #{tpu_custom_call.1} parent=0 // pred_fallthru
    _
  // Predicated region
  $region10: #{tpu_custom_call.1} parent=0 // pred_check
    _
  $region11: #{tpu_custom_call.1} parent=0 // pred_check_branch
    %13 = sbr.rel (0) target = $region13
  $region12: #{tpu_custom_call.1} parent=0 // pred_region
    _
  $region13: #{tpu_custom_call.1} parent=0 // pred_fallthru
    _
  %v15 = vld [vmem:[%s0] sm:$0xf]
  %v16 = vld [vmem:[%s0 + $0x4] sm:$0xf]
  %v17 = vld [vmem:[%s0 + $0x8] sm:$0xf]
  %v18 = vld [vmem:[%s0 + $0xc] sm:$0xf]
  %v19 = vld [vmem:[%s0 + $0x10] sm:$0xf]
  %v20 = vld [vmem:[%s0 + $0x14] sm:$0xf]
  %v21 = vld [vmem:[%s0 + $0x18] sm:$0xf]
  %v22 = vld [vmem:[%s0 + $0x1c] sm:$0xf]
  %v23 = vld [vmem:[%s0 + $0x20] sm:$0xf]
  %v24 = vld [vmem:[%s0 + $0x24] sm:$0xf]
  %v25 = vld [vmem:[%s0 + $0x28] sm:$0xf]
  %v26 = vld [vmem:[%s0 + $0x2c] sm:$0xf]
  %v27 = vld [vmem:[%s0 + $0x30] sm:$0xf]
  %v28 = vld [vmem:[%s0 + $0x34] sm:$0xf]
  %v29 = vld [vmem:[%s0 + $0x38] sm:$0xf]
  %v30 = vld [vmem:[%s0 + $0x3c] sm:$0xf]
  %v31 = vld [vmem:[%s1] sm:$0xf]
  %v32 = vld [vmem:[%s1 + $0x4] sm:$0xf]
  %v33 = vld [vmem:[%s1 + $0x8] sm:$0xf]
  %v34 = vld [vmem:[%s1 + $0xc] sm:$0xf]
  %v35 = vld [vmem:[%s2] sm:$0x1]
  %v37 = vlaneseq
  %v38 = vshrl.u32 %v37, 7
  %v39 = vsub.s32 0, %v38
  %v40 = vrot.slane %v35, %v39
  %v58 = vunpack.c.l.b16 %v15
  %v59 = vunpack.c.l.b16 %v16
  %v60 = vunpack.c.l.b16 %v17
  %v61 = vunpack.c.l.b16 %v18
  %v62 = vunpack.c.l.b16 %v19
  %v63 = vunpack.c.l.b16 %v20
  %v64 = vunpack.c.l.b16 %v21
  %v65 = vunpack.c.l.b16 %v22
  %v66 = vunpack.c.l.b16 %v23
  %v67 = vunpack.c.l.b16 %v24
  %v68 = vunpack.c.l.b16 %v25
  %v69 = vunpack.c.l.b16 %v26
  %v70 = vunpack.c.l.b16 %v27
  %v71 = vunpack.c.l.b16 %v28
  %v72 = vunpack.c.l.b16 %v29
  %v73 = vunpack.c.l.b16 %v30
  %v74 = vpack.c.b16 %v59, %v58
  %v75 = vpack.c.b16 %v61, %v60
  %v76 = vpack.c.b16 %v63, %v62
  %v77 = vpack.c.b16 %v65, %v64
  %v78 = vpack.c.b16 %v67, %v66
  %v79 = vpack.c.b16 %v69, %v68
  %v80 = vpack.c.b16 %v71, %v70
  %v81 = vpack.c.b16 %v73, %v72
  %v86 = vunpack.c.l.b16 %v31
  %v87 = vunpack.c.l.b16 %v32
  %v88 = vunpack.c.l.b16 %v33
  %v89 = vunpack.c.l.b16 %v34
  %v90 = vpack.c.b16 %v87, %v86
  %v91 = vpack.c.b16 %v89, %v88
  %vm94 = vcmask 261120
  %v96 = vsel %vm94, %v74, 0
  %v99 = vsel %vm94, %v75, 0
  %v102 = vsel %vm94, %v76, 0
  %v105 = vsel %vm94, %v77, 0
  %v108 = vsel %vm94, %v78, 0
  %v111 = vsel %vm94, %v79, 0
  %v114 = vsel %vm94, %v80, 0
  %v117 = vsel %vm94, %v81, 0
  %119 = vmatprep.subr.bf16.mxu0 0
  %120 = vmatpush1.bf16.msra.mxu0 %v90
  %121 = vmatprep.subr.bf16.mxu0 0
  %122 = vmatpush1.bf16.msra.mxu0 %v91
  %123 = vmatprep.subr.bf16.mxu0 0
  %124 = vmatpush1.bf16.msra.mxu0 0
  %125 = vmatprep.subr.bf16.mxu0 0
  %126 = vmatpush1.bf16.msra.mxu0 0
  %127 = vmatprep.subr.bf16.mxu0 0
  %128 = vmatpush1.bf16.msra.mxu0 0
  %129 = vmatprep.subr.bf16.mxu0 0
  %130 = vmatpush1.bf16.msra.mxu0 0
  %131 = vmatprep.subr.bf16.mxu0 0
  %132 = vmatpush1.bf16.msra.mxu0 0
  %133 = vmatprep.subr.bf16.mxu0 0
  %134 = vmatpush1.bf16.msra.mxu0 0
  %135 = vmatprep.subr.bf16.mxu0 0
  %136 = vmatpush1.bf16.msra.mxu0 0
  %137 = vmatprep.subr.bf16.mxu0 0
  %138 = vmatpush1.bf16.msra.mxu0 0
  %139 = vmatprep.subr.bf16.mxu0 0
  %140 = vmatpush1.bf16.msra.mxu0 0
  %141 = vmatprep.subr.bf16.mxu0 0
  %142 = vmatpush1.bf16.msra.mxu0 0
  %143 = vmatprep.subr.bf16.mxu0 0
  %144 = vmatpush1.bf16.msra.mxu0 0
  %145 = vmatprep.subr.bf16.mxu0 0
  %146 = vmatpush1.bf16.msra.mxu0 0
  %147 = vmatprep.subr.bf16.mxu0 0
  %148 = vmatpush1.bf16.msra.mxu0 0
  %149 = vmatprep.subr.bf16.mxu0 0
  %150 = vmatpush1.bf16.msra.mxu0 0
  %151 = vmatprep.mubr.bf16.mxu0 0
  %152 = vmatmul.mubr.bf16.gmra.mrb[0].mxu0 %v96
  %v153 = vpop.f32.mrb[0].mxu0
  %v154 = vadd.f32 %v40, %v153
  %v155 = vpop.f32.mrb[0].mxu0
  %v156 = vpop.f32.mrb[0].mxu0
  %v157 = vadd.f32 %v40, %v156
  %v158 = vpop.f32.mrb[0].mxu0
  %159 = vmatprep.mubr.bf16.mxu0 0
  %160 = vmatmul.mubr.bf16.gmra.mrb[0].mxu0 %v99
  %v161 = vpop.f32.mrb[0].mxu0
  %v162 = vadd.f32 %v40, %v161
  %v163 = vpop.f32.mrb[0].mxu0
  %v164 = vpop.f32.mrb[0].mxu0
  %v165 = vadd.f32 %v40, %v164
  %v166 = vpop.f32.mrb[0].mxu0
  %167 = vmatprep.mubr.bf16.mxu0 0
  %168 = vmatmul.mubr.bf16.gmra.mrb[0].mxu0 %v102
  %v169 = vpop.f32.mrb[0].mxu0
  %v170 = vadd.f32 %v40, %v169
  %v171 = vpop.f32.mrb[0].mxu0
  %v172 = vpop.f32.mrb[0].mxu0
  %v173 = vadd.f32 %v40, %v172
  %v174 = vpop.f32.mrb[0].mxu0
  %175 = vmatprep.mubr.bf16.mxu0 0
  %176 = vmatmul.mubr.bf16.gmra.mrb[0].mxu0 %v105
  %v177 = vpop.f32.mrb[0].mxu0
  %v178 = vadd.f32 %v40, %v177
  %v179 = vpop.f32.mrb[0].mxu0
  %v180 = vpop.f32.mrb[0].mxu0
  %v181 = vadd.f32 %v40, %v180
  %v182 = vpop.f32.mrb[0].mxu0
  %183 = vmatprep.mubr.bf16.mxu0 0
  %184 = vmatmul.mubr.bf16.gmra.mrb[0].mxu0 %v108
  %v185 = vpop.f32.mrb[0].mxu0
  %v186 = vadd.f32 %v40, %v185
  %v187 = vpop.f32.mrb[0].mxu0
  %v188 = vpop.f32.mrb[0].mxu0
  %v189 = vadd.f32 %v40, %v188
  %v190 = vpop.f32.mrb[0].mxu0
  %191 = vmatprep.mubr.bf16.mxu0 0
  %192 = vmatmul.mubr.bf16.gmra.mrb[0].mxu0 %v111
  %v193 = vpop.f32.mrb[0].mxu0
  %v194 = vadd.f32 %v40, %v193
  %v195 = vpop.f32.mrb[0].mxu0
  %v196 = vpop.f32.mrb[0].mxu0
  %v197 = vadd.f32 %v40, %v196
  %v198 = vpop.f32.mrb[0].mxu0
  %199 = vmatprep.mubr.bf16.mxu0 0
  %200 = vmatmul.mubr.bf16.gmra.mrb[0].mxu0 %v114
  %v201 = vpop.f32.mrb[0].mxu0
  %v202 = vadd.f32 %v40, %v201
  %v203 = vpop.f32.mrb[0].mxu0
  %v204 = vpop.f32.mrb[0].mxu0
  %v205 = vadd.f32 %v40, %v204
  %v206 = vpop.f32.mrb[0].mxu0
  %207 = vmatprep.mubr.bf16.mxu0 0
  %208 = vmatmul.mubr.bf16.gmra.mrb[0].mxu0 %v117
  %v209 = vpop.f32.mrb[0].mxu0
  %v210 = vadd.f32 %v40, %v209
  %v211 = vpop.f32.mrb[0].mxu0
  %v212 = vpop.f32.mrb[0].mxu0
  %v213 = vadd.f32 %v40, %v212
  %v214 = vpop.f32.mrb[0].mxu0
  %215 = vdwg.mxu0
  %v216 = vmax.f32 %v154, 0.0
  %v217 = vmax.f32 %v157, 0.0
  %v218 = vmax.f32 %v162, 0.0
  %v219 = vmax.f32 %v165, 0.0
  %v220 = vmax.f32 %v170, 0.0
  %v221 = vmax.f32 %v173, 0.0
  %v222 = vmax.f32 %v178, 0.0
  %v223 = vmax.f32 %v181, 0.0
  %v224 = vmax.f32 %v186, 0.0
  %v225 = vmax.f32 %v189, 0.0
  %v226 = vmax.f32 %v194, 0.0
  %v227 = vmax.f32 %v197, 0.0
  %v228 = vmax.f32 %v202, 0.0
  %v229 = vmax.f32 %v205, 0.0
  %v230 = vmax.f32 %v210, 0.0
  %v231 = vmax.f32 %v213, 0.0
  %vm232 = vcmask 64512
  %233 = vst.msk [vmem:[%s3] sm:$0xff] %vm232, %v216
  %234 = vst.msk [vmem:[%s3 + $0x8] sm:$0xff] %vm232, %v217
  %235 = vst.msk [vmem:[%s3 + $0x10] sm:$0xff] %vm232, %v218
  %236 = vst.msk [vmem:[%s3 + $0x18] sm:$0xff] %vm232, %v219
  %237 = vst.msk [vmem:[%s3 + $0x20] sm:$0xff] %vm232, %v220
  %238 = vst.msk [vmem:[%s3 + $0x28] sm:$0xff] %vm232, %v221
  %239 = vst.msk [vmem:[%s3 + $0x30] sm:$0xff] %vm232, %v222
  %240 = vst.msk [vmem:[%s3 + $0x38] sm:$0xff] %vm232, %v223
  %241 = vst.msk [vmem:[%s3 + $0x40] sm:$0xff] %vm232, %v224
  %242 = vst.msk [vmem:[%s3 + $0x48] sm:$0xff] %vm232, %v225
  %243 = vst.msk [vmem:[%s3 + $0x50] sm:$0xff] %vm232, %v226
  %244 = vst.msk [vmem:[%s3 + $0x58] sm:$0xff] %vm232, %v227
  %245 = vst.msk [vmem:[%s3 + $0x60] sm:$0xff] %vm232, %v228
  %246 = vst.msk [vmem:[%s3 + $0x68] sm:$0xff] %vm232, %v229
  %247 = vst.msk [vmem:[%s3 + $0x70] sm:$0xff] %vm232, %v230
  %248 = vst.msk [vmem:[%s3 + $0x78] sm:$0xff] %vm232, %v231
  // Predicated region
  $region14: #{tpu_custom_call.1} parent=0 // pred_check
    _
  $region15: #{tpu_custom_call.1} parent=0 // pred_check_branch
    %250 = sbr.rel (0) target = $region17
  $region16: #{tpu_custom_call.1} parent=0 // pred_region
    _
  $region17: #{tpu_custom_call.1} parent=0 // pred_fallthru
    _
  // Predicated region
  $region18: #{tpu_custom_call.1} parent=0 // pred_check
    _
  $region19: #{tpu_custom_call.1} parent=0 // pred_check_branch
    %252 = sbr.rel (0) target = $region21
  $region20: #{tpu_custom_call.1} parent=0 // pred_region
    _
  $region21: #{tpu_custom_call.1} parent=0 // pred_fallthru
    _

</llo_original>
